<compile_context>
chip_gen: v5e
topology: v5e:2x2
jax: 0.10.0
libtpu: 0.0.40
codegen_flags: <defaults>
</compile_context>

<pallas_src>
import jax
import jax.numpy as jnp
from jax.experimental import pallas as pl
from jax.experimental.pallas import tpu as pltpu

global_cluster = None


def _round_up(x, m):
    return ((x + m - 1) // m) * m


def _matmul_kernel(x_ref, w_ref, o_ref, acc_ref):
    """One (tm, tn) output tile of y = x @ w_t, accumulated over the K grid axis."""
    k = pl.program_id(2)

    @pl.when(k == 0)
    def _():
        acc_ref[...] = jnp.zeros_like(acc_ref)

    acc_ref[...] += jnp.dot(x_ref[...], w_ref[...],
                            preferred_element_type=jnp.float32)

    @pl.when(k == pl.num_programs(2) - 1)
    def _():
        o_ref[...] = acc_ref[...].astype(o_ref.dtype)


def matmul_x_wt(x, w_t, *, tm=256, tn=256, tk=512, out_dtype=jnp.float32):
    """y = x @ w_t via Pallas.  x: (M, K), w_t: (K, N) -> y: (M, N).

    Operands are cast to bf16 for the MXU; accumulation is f32.  Inputs are
    zero-padded up to tile multiples (so edge tiles are exact) and the output
    is sliced back to (M, N).
    """
    M, K = x.shape
    K2, N = w_t.shape
    assert K == K2, (x.shape, w_t.shape)

    # Clamp tiles to the (aligned-up) problem dims; keep (sublane, lane)
    # alignment: tm multiple of 8, tn/tk multiples of 128.
    tm = min(tm, _round_up(M, 8))
    tn = min(tn, _round_up(N, 128))
    tk = min(tk, _round_up(K, 128))

    Mp, Np, Kp = _round_up(M, tm), _round_up(N, tn), _round_up(K, tk)

    xb = x.astype(jnp.bfloat16)
    wb = w_t.astype(jnp.bfloat16)
    if (Mp, Kp) != (M, K):
        xb = jnp.pad(xb, ((0, Mp - M), (0, Kp - K)))
    if (Kp, Np) != (K, N):
        wb = jnp.pad(wb, ((0, Kp - K), (0, Np - N)))

    grid = (Mp // tm, Np // tn, Kp // tk)

    flops = 2 * Mp * Np * Kp
    bytes_accessed = 2 * (Mp * Kp + Kp * Np) + 4 * Mp * Np

    yp = pl.pallas_call(
        _matmul_kernel,
        out_shape=jax.ShapeDtypeStruct((Mp, Np), out_dtype),
        grid_spec=pltpu.PrefetchScalarGridSpec(
            num_scalar_prefetch=0,
            grid=grid,
            in_specs=[
                pl.BlockSpec((tm, tk), lambda m, n, k: (m, k)),   # x tile
                pl.BlockSpec((tk, tn), lambda m, n, k: (k, n)),   # w_t tile
            ],
            out_specs=pl.BlockSpec((tm, tn), lambda m, n, k: (m, n)),
            scratch_shapes=[pltpu.VMEM((tm, tn), jnp.float32)],
        ),
        compiler_params=pltpu.CompilerParams(
            dimension_semantics=("parallel", "parallel", "arbitrary"),
            vmem_limit_bytes=48 * 1024 * 1024),
        cost_estimate=pl.CostEstimate(
            flops=flops, transcendentals=0, bytes_accessed=bytes_accessed),
    )(xb, wb)

    if (Mp, Np) != (M, N):
        yp = yp[:M, :N]
    return yp


class DownLayer:
    """JAX/Pallas port of the PyTorch DownLayer forward pass."""

    def __init__(self, weight, act_list, num, sparsity, memory_limit):
        weight = jnp.asarray(weight, jnp.float32)
        self.out_features = weight.shape[0]
        self.in_features = weight.shape[1]
        # Pre-transpose once to (K, N) and store in bf16 (MXU-native layout/dtype).
        self.weight_t = weight.T.astype(jnp.bfloat16)
        self.remained_neurons = int(weight.shape[1] * sparsity)
        self.memory_limit = memory_limit
        # filtered_W is stored in transposed (remained_neurons, out_features) layout.
        self.filtered_W_t = jnp.zeros(
            (self.remained_neurons, self.out_features), jnp.bfloat16)
        # Matches torch's `act_list[:][:remained_neurons]` (slice along dim 0).
        self.act_list = jnp.asarray(act_list)[:self.remained_neurons]
        self.num = num
        self.weight_updated = False

    def forward(self, x):
        global global_cluster
        B, S, F = x.shape
        if S > 1:
            # Prefill branch: dense matmul against full weight.
            self.weight_updated = False
            y = matmul_x_wt(x.reshape(B * S, F), self.weight_t)
            y = y.reshape(B, S, self.out_features)
            if self.num == 25:
                # TODO(synk): sklearn kmeans.predict / MultiLabelBinarizer.transform
                # (fitted external objects) have no Pallas/JAX equivalent; cluster
                # selection is stubbed with a deterministic value.
                global_cluster = 0
            return y
        else:
            # Decode branch: GEMV against the column-gathered filtered weight.
            if not self.weight_updated:
                cluster_num = global_cluster
                activated = self.act_list[cluster_num]        # (remained_neurons,)
                # weight[:, activated].T  ==  weight_t[activated, :]
                self.filtered_W_t = jnp.take(self.weight_t, activated, axis=0)
                self.weight_updated = True
            y = matmul_x_wt(x.reshape(B * S, F), self.filtered_W_t)
            return y.reshape(B, S, self.out_features)


if __name__ == "__main__":
    key = jax.random.PRNGKey(0)
    k_w, k_xp, k_xd, k_act = jax.random.split(key, 4)

    OUT_F = 512        # hidden size (weight rows / output features)
    IN_F = 1024        # intermediate size (weight cols / reduction dim)
    SPARSITY = 0.5
    R = int(IN_F * SPARSITY)   # remained_neurons = 512
    NUM_CLUSTERS = 4
    B, S = 2, 64

    weight = jax.random.normal(k_w, (OUT_F, IN_F), jnp.float32)
    # act_list[c] = indices (into in_features) of neurons active for cluster c.
    act_list = jnp.stack([
        jax.random.permutation(jax.random.fold_in(k_act, c), IN_F)[:R]
        for c in range(NUM_CLUSTERS)
    ]).astype(jnp.int32)

    layer = DownLayer(weight, act_list, num=25, sparsity=SPARSITY,
                      memory_limit=False)

    # bf16-rounded operands for the reference (kernel uses bf16 MXU inputs,
    # f32 accumulation), so only accumulation-order error remains.
    def _bf(a):
        return a.astype(jnp.bfloat16).astype(jnp.float32)

    # --- prefill pass: x (B, S, IN_F), seq > 1 ---
    x_prefill = jax.random.normal(k_xp, (B, S, IN_F), jnp.float32)
    y_prefill = layer.forward(x_prefill)
    y_prefill = jax.block_until_ready(y_prefill)
    ref_prefill = jnp.einsum("bsk,nk->bsn", _bf(x_prefill), _bf(weight))
    assert y_prefill.shape == (B, S, OUT_F)
    assert jnp.allclose(y_prefill, ref_prefill, rtol=2e-2, atol=2e-2), (
        float(jnp.max(jnp.abs(y_prefill - ref_prefill))))

    # --- decode pass: x (B, 1, R) over sparsified neurons ---
    x_decode = jax.random.normal(k_xd, (B, 1, R), jnp.float32)
    y_decode = layer.forward(x_decode)
    y_decode = jax.block_until_ready(y_decode)
    filtered_ref = jnp.take(weight, act_list[global_cluster], axis=1)
    ref_decode = jnp.einsum("bsk,nk->bsn", _bf(x_decode), _bf(filtered_ref))
    assert y_decode.shape == (B, 1, OUT_F)
    assert jnp.allclose(y_decode, ref_decode, rtol=2e-2, atol=2e-2), (
        float(jnp.max(jnp.abs(y_decode - ref_decode))))

    print("KERNEL_OK")
</pallas_src>

<mosaic_0001>
module attributes {stable_mosaic.version = 11 : i64} {
  func.func @_matmul_kernel(%arg0: i32, %arg1: i32, %arg2: i32, %arg3: memref<128x512xbf16, #tpu.memory_space<vmem>>, %arg4: memref<512x256xbf16, #tpu.memory_space<vmem>>, %arg5: memref<128x256xf32, #tpu.memory_space<vmem>>, %arg6: memref<128x256xf32, #tpu.memory_space<vmem>>) attributes {dimension_semantics = [#tpu.dimension_semantics<parallel>, #tpu.dimension_semantics<parallel>, #tpu.dimension_semantics<arbitrary>], iteration_bounds = array<i64: 1, 2, 2>, scalar_prefetch = 0 : i64, scratch_operands = 1 : i64, tpu.core_type = #tpu.core_type<tc>, window_params = [{transform_indices = @transform_0, window_bounds = array<i64: 128, 512>}, {transform_indices = @transform_1, window_bounds = array<i64: 512, 256>}, {transform_indices = @transform_2, window_bounds = array<i64: 128, 256>}]} {
    %c0_i32 = arith.constant 0 : i32
    %0 = arith.cmpi eq, %arg2, %c0_i32 : i32
    %1 = arith.extui %0 : i1 to i32
    %c0_i32_0 = arith.constant 0 : i32
    %2 = arith.cmpi ne, %1, %c0_i32_0 : i32
    scf.if %2 {
      %cst_9 = arith.constant 0.000000e+00 : f32
      %12 = vector.broadcast %cst_9 : f32 to vector<128x256xf32>
      %c0_10 = arith.constant 0 : index
      %c0_11 = arith.constant 0 : index
      %13 = vector.load %arg6[%c0_10, %c0_11] : memref<128x256xf32, #tpu.memory_space<vmem>>, vector<128x256xf32>
      tpu.vector_store %arg6[%c0_10, %c0_11], %12 {strides = array<i32>} : memref<128x256xf32, #tpu.memory_space<vmem>>, vector<128x256xf32>,
    } else {
    }
    %c0 = arith.constant 0 : index
    %c0_1 = arith.constant 0 : index
    %3 = vector.load %arg6[%c0, %c0_1] : memref<128x256xf32, #tpu.memory_space<vmem>>, vector<128x256xf32>
    %c0_2 = arith.constant 0 : index
    %c0_3 = arith.constant 0 : index
    %4 = vector.load %arg3[%c0_2, %c0_3] : memref<128x512xbf16, #tpu.memory_space<vmem>>, vector<128x512xbf16>
    %c0_4 = arith.constant 0 : index
    %c0_5 = arith.constant 0 : index
    %5 = vector.load %arg4[%c0_4, %c0_5] : memref<512x256xbf16, #tpu.memory_space<vmem>>, vector<512x256xbf16>
    %cst = arith.constant dense<0.000000e+00> : vector<128x256xf32>
    %6 = tpu.matmul %4, %5, %cst {dimension_numbers = #tpu.dot_dimension_numbers<[1], [0], [0], [1], [0, 0, 1, 1], [], []>} : vector<128x512xbf16>, vector<512x256xbf16>, vector<128x256xf32> -> vector<128x256xf32>
    %7 = arith.addf %3, %6 : vector<128x256xf32>
    %c0_6 = arith.constant 0 : index
    %c0_7 = arith.constant 0 : index
    %8 = vector.load %arg6[%c0_6, %c0_7] : memref<128x256xf32, #tpu.memory_space<vmem>>, vector<128x256xf32>
    tpu.vector_store %arg6[%c0_6, %c0_7], %7 {strides = array<i32>} : memref<128x256xf32, #tpu.memory_space<vmem>>, vector<128x256xf32>,
    %c1_i32 = arith.constant 1 : i32
    %9 = arith.cmpi eq, %arg2, %c1_i32 : i32
    %10 = arith.extui %9 : i1 to i32
    %c0_i32_8 = arith.constant 0 : i32
    %11 = arith.cmpi ne, %10, %c0_i32_8 : i32
    scf.if %11 {
      %c0_9 = arith.constant 0 : index
      %c0_10 = arith.constant 0 : index
      %12 = vector.load %arg6[%c0_9, %c0_10] : memref<128x256xf32, #tpu.memory_space<vmem>>, vector<128x256xf32>
      %c0_11 = arith.constant 0 : index
      %c0_12 = arith.constant 0 : index
      %13 = vector.load %arg5[%c0_11, %c0_12] : memref<128x256xf32, #tpu.memory_space<vmem>>, vector<128x256xf32>
      tpu.vector_store %arg5[%c0_11, %c0_12], %12 {strides = array<i32>} : memref<128x256xf32, #tpu.memory_space<vmem>>, vector<128x256xf32>,
    } else {
    }
    return
  }
  func.func @transform_0(%arg0: i32, %arg1: i32, %arg2: i32) -> (i32, i32) {
    %c0_i32 = arith.constant 0 : i32
    return %arg0, %arg2 : i32, i32
  }
  func.func @transform_1(%arg0: i32, %arg1: i32, %arg2: i32) -> (i32, i32) {
    %c0_i32 = arith.constant 0 : i32
    return %arg2, %arg1 : i32, i32
  }
  func.func @transform_2(%arg0: i32, %arg1: i32, %arg2: i32) -> (i32, i32) {
    %c0_i32 = arith.constant 0 : i32
    return %arg0, %arg1 : i32, i32
  }
}

</mosaic_0001>

<llo_original>
// kernel: tpu_custom_call.1
$region0: #{tpu_custom_call.1}
  #allocation0 [shape = 'u32[]', space=smem, size = 0x4, offset = 0x4, fixed_abs, tag = 'smem constant byte address 0x4 - core index']
  #allocation1 [shape = 'u32[72,128]{1,0:T(1,128)}', space=vmem, size = 0x9000, scoped, tag = 'internal scratch']
  #allocation2 [shape = 'f32[128,256]{1,0:T(8,128)}', space=vmem, size = 0x20000, scoped, tag = 'scratch operand']
  %s0 = inlined_call_operand.hbm [shape: bf16[128,1024], index: 0, kind: input, shape index: {}]
  %s1 = inlined_call_operand.hbm [shape: bf16[1024,512], index: 1, kind: input, shape index: {}]
  %s2 = inlined_call_operand.hbm [shape: f32[128,512], index: 2, kind: output, shape index: {}]
  %s3 = sld [smem:[#allocation0]]
  $region57: #{tpu_custom_call.1} parent=0
    _
  %s5 = ssub.s32 1, %s3
  %s6 = scalar_select 0, %s5, %s3
  $region1: #{tpu_custom_call.1} parent=0
    #allocation3 [shape = 'u8[262144]{0}', space=vmem, size = 0x40000, scoped, tag = 'input window, operand 0']
    #allocation4 [shape = 's32[2]{0}', space=sflag, size = 0x8, scoped, tag = 'scoped memory for tpu_custom_call.1']
    #allocation5 [shape = 's32[2]{0}', space=sflag, size = 0x8, scoped, tag = 'scoped memory for tpu_custom_call.1']
    #allocation6 [shape = 'u8[524288]{0}', space=vmem, size = 0x80000, scoped, tag = 'input window, operand 1']
    #allocation7 [shape = 's32[2]{0}', space=sflag, size = 0x8, scoped, tag = 'scoped memory for tpu_custom_call.1']
    #allocation8 [shape = 'u8[262144]{0}', space=vmem, size = 0x40000, scoped, tag = 'output window, operand 0']
    %7 = vsyncpa [#allocation4], 0
    %s8 = scalar_lea.sflag [#allocation4], 1
    %9 = vsyncpa %s8, 0
    %10 = vsyncpa [#allocation7], 0
    %s11 = scalar_lea.sflag [#allocation7], 1
    %12 = vsyncpa %s11, 0
    %13 = vsyncpa [#allocation5], 0
    %s14 = scalar_lea.sflag [#allocation5], 1
    %15 = vsyncpa %s14, 0
    loop: start=0, step=1, limit=6
    $region2: #{tpu_custom_call.1} parent=1 // loop_pre_header
      _
    $region3: #{tpu_custom_call.1} parent=1 // loop_header
      %s17 = sphi 0, %s21
      %p18 = scmp.ge.s32.totalorder %s17, 6
      %s24 = sphi 0, %s43
      %s25 = sphi 0, %s39
      %s26 = sphi 0, %s35
      %s27 = sphi 0, %s24
      %s28 = sphi 0, %s25
      %s29 = sphi 0, %s26
      %s30 = sphi 0, %s27
      %s31 = sphi 0, %s28
      %s32 = sphi 0, %s29
      %s48 = sphi 0, %s50
      %s51 = sphi 0, %s48
      %s52 = sphi 0, %s51
      %s68 = sphi 0, %s52
      %s76 = sphi 0, %s78
      %s79 = sphi 0, %s76
      %s80 = sphi 0, %s79
      %s96 = sphi 0, %s80
      %s104 = sphi 0, %s106
      %s107 = sphi 0, %s104
      %s108 = sphi 0, %s107
      %s124 = sphi 0, %s108
    $region4: #{tpu_custom_call.1} parent=1 // loop_header_branch
      %20 = sbr.rel (%p18) target = $region8
    $region5: #{tpu_custom_call.1} parent=1 // loop_body
      %s22 = ssub.s32 %s17, 1
      %s23 = ssub.s32 %s17, 2
      %s33 = sadd.s32 1, %s26
      %p34 = scmp.ge.s32.totalorder %s33, 2
      %s35 = scalar_select %p34, 0, %s33
      %s36 = sadd.s32 1, %s25
      %s37 = scalar_select %p34, %s36, %s25
      %p38 = scmp.ge.s32.totalorder %s37, 2
      %s39 = scalar_select %p38, 0, %s37
      %s40 = sadd.s32 1, %s24
      %s41 = scalar_select %p38, %s40, %s24
      %p42 = scmp.ge.s32.totalorder %s41, 1
      %s43 = scalar_select %p42, 0, %s41
      %s44 = ssub.s32 %s24, %s43
      %s45 = ssub.s32 %s26, %s35
      %s46 = sor.u32 %s44, %s45
      %p47 = scmp.eq.s32.totalorder %s46, 0
      %s49 = sadd.s32 %s48, 1
      %s50 = scalar_select %p47, %s48, %s49
      %p53 = pneg %p47
      %p54 = scmp.eq.s32.totalorder %s17, 3
      %p55 = por %p53, %p54
      %p56 = scmp.ne.s32.totalorder %s48, %s51
      %p57 = scmp.eq.s32.totalorder %s17, 0
      %p58 = por %p56, %p57
      %p59 = scmp.ne.s32.totalorder %s48, %s51
      %p60 = scmp.eq.s32.totalorder %s22, 3
      %p61 = por %p59, %p60
      %p62 = scmp.ne.s32.totalorder %s51, %s52
      %p63 = scmp.eq.s32.totalorder %s22, 0
      %p64 = por %p62, %p63
      %p65 = scmp.ne.s32.totalorder %s51, %s52
      %p66 = scmp.eq.s32.totalorder %s23, 3
      %p67 = por %p65, %p66
      %p69 = scmp.ne.s32.totalorder %s52, %s68
      %p70 = scmp.eq.s32.totalorder %s23, 0
      %p71 = por %p69, %p70
      %s72 = ssub.s32 %s26, %s35
      %s73 = ssub.s32 %s25, %s39
      %s74 = sor.u32 %s72, %s73
      %p75 = scmp.eq.s32.totalorder %s74, 0
      %s77 = sadd.s32 %s76, 1
      %s78 = scalar_select %p75, %s76, %s77
      %p81 = pneg %p75
      %p82 = scmp.eq.s32.totalorder %s17, 3
      %p83 = por %p81, %p82
      %p84 = scmp.ne.s32.totalorder %s76, %s79
      %p85 = scmp.eq.s32.totalorder %s17, 0
      %p86 = por %p84, %p85
      %p87 = scmp.ne.s32.totalorder %s76, %s79
      %p88 = scmp.eq.s32.totalorder %s22, 3
      %p89 = por %p87, %p88
      %p90 = scmp.ne.s32.totalorder %s79, %s80
      %p91 = scmp.eq.s32.totalorder %s22, 0
      %p92 = por %p90, %p91
      %p93 = scmp.ne.s32.totalorder %s79, %s80
      %p94 = scmp.eq.s32.totalorder %s23, 3
      %p95 = por %p93, %p94
      %p97 = scmp.ne.s32.totalorder %s80, %s96
      %p98 = scmp.eq.s32.totalorder %s23, 0
      %p99 = por %p97, %p98
      %s100 = ssub.s32 %s24, %s43
      %s101 = ssub.s32 %s25, %s39
      %s102 = sor.u32 %s100, %s101
      %p103 = scmp.eq.s32.totalorder %s102, 0
      %s105 = sadd.s32 %s104, 1
      %s106 = scalar_select %p103, %s104, %s105
      %p109 = pneg %p103
      %p110 = scmp.eq.s32.totalorder %s17, 3
      %p111 = por %p109, %p110
      %p112 = scmp.ne.s32.totalorder %s104, %s107
      %p113 = scmp.eq.s32.totalorder %s17, 0
      %p114 = por %p112, %p113
      %p115 = scmp.ne.s32.totalorder %s104, %s107
      %p116 = scmp.eq.s32.totalorder %s22, 3
      %p117 = por %p115, %p116
      %p118 = scmp.ne.s32.totalorder %s107, %s108
      %p119 = scmp.eq.s32.totalorder %s22, 0
      %p120 = por %p118, %p119
      %p121 = scmp.ne.s32.totalorder %s107, %s108
      %p122 = scmp.eq.s32.totalorder %s23, 3
      %p123 = por %p121, %p122
      %p125 = scmp.ne.s32.totalorder %s108, %s124
      %p126 = scmp.eq.s32.totalorder %s23, 0
      %p127 = por %p125, %p126
      %p128 = scmp.le.s32.totalorder 1, %s17
      %p129 = scmp.lt.s32.totalorder %s17, 5
      %p130 = pnand %p128, %p129
      %p131 = pneg %p130
      // Predicated region
      $region9: #{tpu_custom_call.1} parent=5 // pred_check
        _
      $region10: #{tpu_custom_call.1} parent=5 // pred_check_branch
        %133 = sbr.rel (%p130) target = $region12
      $region11: #{tpu_custom_call.1} parent=5 // pred_region
        %s134 = ssub.s32 %s17, 1
      $region12: #{tpu_custom_call.1} parent=5 // pred_fallthru
        _
      %p135 = scmp.lt.s32.totalorder %s17, 4
      // Predicated region
      $region13: #{tpu_custom_call.1} parent=5 // pred_check
        %p136 = pneg %p135
      $region14: #{tpu_custom_call.1} parent=5 // pred_check_branch
        %138 = sbr.rel (%p136) target = $region16
      $region15: #{tpu_custom_call.1} parent=5 // pred_region
        // Predicated region
        $region17: #{tpu_custom_call.1} parent=15 // pred_check
          %p139 = pneg %p58
        $region18: #{tpu_custom_call.1} parent=15 // pred_check_branch
          %141 = sbr.rel (%p139) target = $region20
        $region19: #{tpu_custom_call.1} parent=15 // pred_region
          %s142 = sand.u32 %s48, 1
          %s143 = scalar_lea.sflag [#allocation4], %s142
          %s144 = sand.u32 %s48, 1
          %s145 = smul.addr %s144, 256
          %s146 = scalar_lea.vmem [#allocation3], %s145
          %s147 = smul.u32 16, %s24
          %s148 = smul.u32 4, %s26
          %150 = vsyncadd %s143, 0
          %s151 = smul.addr %s147, 8
          %s152 = sadd.s32 %s148, %s151
          %s153 = smul.addr %s152, 4
          %s154 = scalar_lea.hbm %s0, %s153
          %s155 = sshll.u32 %s154, 4
          %s156 = int_to_ptr.hbm [resolvable:$true] %s155
          %s157 = sshll.u32 %s146, 4
          %s158 = int_to_ptr.vmem [resolvable:$true] %s157
          %163 = dma.hbm_to_vmem [thread:$0]  %s156, 4096, %s158, %s143, 512, 256, 16
        $region20: #{tpu_custom_call.1} parent=15 // pred_fallthru
          _
        // Predicated region
        $region21: #{tpu_custom_call.1} parent=15 // pred_check
          %p164 = pneg %p86
        $region22: #{tpu_custom_call.1} parent=15 // pred_check_branch
          %166 = sbr.rel (%p164) target = $region24
        $region23: #{tpu_custom_call.1} parent=15 // pred_region
          %s167 = sand.u32 %s76, 1
          %s168 = scalar_lea.sflag [#allocation7], %s167
          %s169 = sand.u32 %s76, 1
          %s170 = smul.addr %s169, 512
          %s171 = scalar_lea.vmem [#allocation6], %s170
          %s172 = smul.u32 64, %s26
          %s173 = smul.u32 2, %s25
          %175 = vsyncadd %s168, 0
          %s176 = smul.addr %s172, 4
          %s177 = sadd.s32 %s173, %s176
          %s178 = smul.addr %s177, 4
          %s179 = scalar_lea.hbm %s1, %s178
          %s180 = sshll.u32 %s179, 4
          %s181 = int_to_ptr.hbm [resolvable:$true] %s180
          %s182 = sshll.u32 %s171, 4
          %s183 = int_to_ptr.vmem [resolvable:$true] %s182
          %188 = dma.hbm_to_vmem [thread:$0]  %s181, 8192, %s183, %s168, 256, 128, 8
        $region24: #{tpu_custom_call.1} parent=15 // pred_fallthru
          _
      $region16: #{tpu_custom_call.1} parent=5 // pred_fallthru
        _
      %p189 = scmp.le.s32.totalorder 1, %s17
      %p190 = scmp.lt.s32.totalorder %s17, 5
      %p191 = pnand %p189, %p190
      %p192 = pneg %p191
      // Predicated region
      $region25: #{tpu_custom_call.1} parent=5 // pred_check
        _
      $region26: #{tpu_custom_call.1} parent=5 // pred_check_branch
        %194 = sbr.rel (%p191) target = $region28
      $region27: #{tpu_custom_call.1} parent=5 // pred_region
        %s195 = ssub.s32 %s17, 1
        %s196 = sand.u32 %s51, 1
        %s197 = scalar_lea.sflag [#allocation4], %s196
        %s198 = sand.u32 %s51, 1
        %s199 = smul.addr %s198, 256
        %s200 = scalar_lea.vmem [#allocation3], %s199
        // Predicated region
        $region29: #{tpu_custom_call.1} parent=27 // pred_check
          %p201 = pneg %p64
        $region30: #{tpu_custom_call.1} parent=27 // pred_check_branch
          %203 = sbr.rel (%p201) target = $region32
        $region31: #{tpu_custom_call.1} parent=27 // pred_region
          %205 = dma.done %s197, 4096
        $region32: #{tpu_custom_call.1} parent=27 // pred_fallthru
          _
        %s206 = sand.u32 %s79, 1
        %s207 = scalar_lea.sflag [#allocation7], %s206
        %s208 = sand.u32 %s79, 1
        %s209 = smul.addr %s208, 512
        %s210 = scalar_lea.vmem [#allocation6], %s209
        // Predicated region
        $region33: #{tpu_custom_call.1} parent=27 // pred_check
          %p211 = pneg %p92
        $region34: #{tpu_custom_call.1} parent=27 // pred_check_branch
          %213 = sbr.rel (%p211) target = $region36
        $region35: #{tpu_custom_call.1} parent=27 // pred_region
          %215 = dma.done %s207, 8192
        $region36: #{tpu_custom_call.1} parent=27 // pred_fallthru
          _
        %s216 = sand.u32 %s51, 1
        %s217 = scalar_lea.sflag [#allocation4], %s216
        %s218 = sand.u32 %s51, 1
        %s219 = smul.addr %s218, 256
        %s220 = scalar_lea.vmem [#allocation3], %s219
        %p221 = pneg %p64
        %p222 = pneg %p61
        %s223 = sand.u32 %s79, 1
        %s224 = scalar_lea.sflag [#allocation7], %s223
        %s225 = sand.u32 %s79, 1
        %s226 = smul.addr %s225, 512
        %s227 = scalar_lea.vmem [#allocation6], %s226
        %p228 = pneg %p92
        %p229 = pneg %p89
        %p230 = pneg %p120
        %p231 = pneg %p117
        %s232 = sand.u32 %s107, 1
        %s233 = scalar_lea.sflag [#allocation5], %s232
        %s234 = sand.u32 %s107, 1
        %s235 = smul.addr %s234, 256
        %s236 = scalar_lea.vmem [#allocation8], %s235
        %s237 = smul.u32 16, %s27
        %s238 = smul.u32 4, %s29
        %s239 = smul.u32 64, %s29
        %s240 = smul.u32 2, %s28
        %s241 = smul.u32 16, %s27
        %s242 = smul.u32 2, %s28
        %p243 = scmp.eq.s32.totalorder %s29, 0
        // Predicated region
        $region37: #{tpu_custom_call.1} parent=27 // pred_check
          %p244 = pneg %p243
        $region38: #{tpu_custom_call.1} parent=27 // pred_check_branch
          %246 = sbr.rel (%p244) target = $region40
        $region39: #{tpu_custom_call.1} parent=27 // pred_region
          %247 = vst [vmem:[#allocation2] sm:$0xff] 0.0
          %248 = vst [vmem:[#allocation2 + $0x8] sm:$0xff] 0.0
          %249 = vst [vmem:[#allocation2 + $0x10] sm:$0xff] 0.0
          %250 = vst [vmem:[#allocation2 + $0x18] sm:$0xff] 0.0
          %251 = vst [vmem:[#allocation2 + $0x20] sm:$0xff] 0.0
          %252 = vst [vmem:[#allocation2 + $0x28] sm:$0xff] 0.0
          %253 = vst [vmem:[#allocation2 + $0x30] sm:$0xff] 0.0
          %254 = vst [vmem:[#allocation2 + $0x38] sm:$0xff] 0.0
          %255 = vst [vmem:[#allocation2 + $0x40] sm:$0xff] 0.0
          %256 = vst [vmem:[#allocation2 + $0x48] sm:$0xff] 0.0
          %257 = vst [vmem:[#allocation2 + $0x50] sm:$0xff] 0.0
          %258 = vst [vmem:[#allocation2 + $0x58] sm:$0xff] 0.0
          %259 = vst [vmem:[#allocation2 + $0x60] sm:$0xff] 0.0
          %260 = vst [vmem:[#allocation2 + $0x68] sm:$0xff] 0.0
          %261 = vst [vmem:[#allocation2 + $0x70] sm:$0xff] 0.0
          %262 = vst [vmem:[#allocation2 + $0x78] sm:$0xff] 0.0
          %263 = vst [vmem:[#allocation2 + $0x80] sm:$0xff] 0.0
          %264 = vst [vmem:[#allocation2 + $0x88] sm:$0xff] 0.0
          %265 = vst [vmem:[#allocation2 + $0x90] sm:$0xff] 0.0
          %266 = vst [vmem:[#allocation2 + $0x98] sm:$0xff] 0.0
          %267 = vst [vmem:[#allocation2 + $0xa0] sm:$0xff] 0.0
          %268 = vst [vmem:[#allocation2 + $0xa8] sm:$0xff] 0.0
          %269 = vst [vmem:[#allocation2 + $0xb0] sm:$0xff] 0.0
          %270 = vst [vmem:[#allocation2 + $0xb8] sm:$0xff] 0.0
          %271 = vst [vmem:[#allocation2 + $0xc0] sm:$0xff] 0.0
          %272 = vst [vmem:[#allocation2 + $0xc8] sm:$0xff] 0.0
          %273 = vst [vmem:[#allocation2 + $0xd0] sm:$0xff] 0.0
          %274 = vst [vmem:[#allocation2 + $0xd8] sm:$0xff] 0.0
          %275 = vst [vmem:[#allocation2 + $0xe0] sm:$0xff] 0.0
          %276 = vst [vmem:[#allocation2 + $0xe8] sm:$0xff] 0.0
          %277 = vst [vmem:[#allocation2 + $0xf0] sm:$0xff] 0.0
          %278 = vst [vmem:[#allocation2 + $0xf8] sm:$0xff] 0.0
        $region40: #{tpu_custom_call.1} parent=27 // pred_fallthru
          _
        %v279 = vld [vmem:[#allocation2] sm:$0xff]
        %v280 = vld [vmem:[#allocation2 + $0x8] sm:$0xff]
        %v281 = vld [vmem:[#allocation2 + $0x10] sm:$0xff]
        %v282 = vld [vmem:[#allocation2 + $0x18] sm:$0xff]
        %v283 = vld [vmem:[#allocation2 + $0x20] sm:$0xff]
        %v284 = vld [vmem:[#allocation2 + $0x28] sm:$0xff]
        %v285 = vld [vmem:[#allocation2 + $0x30] sm:$0xff]
        %v286 = vld [vmem:[#allocation2 + $0x38] sm:$0xff]
        %v287 = vld [vmem:[#allocation2 + $0x40] sm:$0xff]
        %v288 = vld [vmem:[#allocation2 + $0x48] sm:$0xff]
        %v289 = vld [vmem:[#allocation2 + $0x50] sm:$0xff]
        %v290 = vld [vmem:[#allocation2 + $0x58] sm:$0xff]
        %v291 = vld [vmem:[#allocation2 + $0x60] sm:$0xff]
        %v292 = vld [vmem:[#allocation2 + $0x68] sm:$0xff]
        %v293 = vld [vmem:[#allocation2 + $0x70] sm:$0xff]
        %v294 = vld [vmem:[#allocation2 + $0x78] sm:$0xff]
        %v295 = vld [vmem:[#allocation2 + $0x80] sm:$0xff]
        %v296 = vld [vmem:[#allocation2 + $0x88] sm:$0xff]
        %v297 = vld [vmem:[#allocation2 + $0x90] sm:$0xff]
        %v298 = vld [vmem:[#allocation2 + $0x98] sm:$0xff]
        %v299 = vld [vmem:[#allocation2 + $0xa0] sm:$0xff]
        %v300 = vld [vmem:[#allocation2 + $0xa8] sm:$0xff]
        %v301 = vld [vmem:[#allocation2 + $0xb0] sm:$0xff]
        %v302 = vld [vmem:[#allocation2 + $0xb8] sm:$0xff]
        %v303 = vld [vmem:[#allocation2 + $0xc0] sm:$0xff]
        %v304 = vld [vmem:[#allocation2 + $0xc8] sm:$0xff]
        %v305 = vld [vmem:[#allocation2 + $0xd0] sm:$0xff]
        %v306 = vld [vmem:[#allocation2 + $0xd8] sm:$0xff]
        %v307 = vld [vmem:[#allocation2 + $0xe0] sm:$0xff]
        %v308 = vld [vmem:[#allocation2 + $0xe8] sm:$0xff]
        %v309 = vld [vmem:[#allocation2 + $0xf0] sm:$0xff]
        %v310 = vld [vmem:[#allocation2 + $0xf8] sm:$0xff]
        %v311 = vld [vmem:[%s200] sm:$0xff]
        %v312 = vld [vmem:[%s200 + $0x8] sm:$0xff]
        %v313 = vld [vmem:[%s200 + $0x10] sm:$0xff]
        %v314 = vld [vmem:[%s200 + $0x18] sm:$0xff]
        %v315 = vld [vmem:[%s200 + $0x20] sm:$0xff]
        %v316 = vld [vmem:[%s200 + $0x28] sm:$0xff]
        %v317 = vld [vmem:[%s200 + $0x30] sm:$0xff]
        %v318 = vld [vmem:[%s200 + $0x38] sm:$0xff]
        %v319 = vld [vmem:[%s200 + $0x40] sm:$0xff]
        %v320 = vld [vmem:[%s200 + $0x48] sm:$0xff]
        %v321 = vld [vmem:[%s200 + $0x50] sm:$0xff]
        %v322 = vld [vmem:[%s200 + $0x58] sm:$0xff]
        %v323 = vld [vmem:[%s200 + $0x60] sm:$0xff]
        %v324 = vld [vmem:[%s200 + $0x68] sm:$0xff]
        %v325 = vld [vmem:[%s200 + $0x70] sm:$0xff]
        %v326 = vld [vmem:[%s200 + $0x78] sm:$0xff]
        %v327 = vld [vmem:[%s200 + $0x80] sm:$0xff]
        %v328 = vld [vmem:[%s200 + $0x88] sm:$0xff]
        %v329 = vld [vmem:[%s200 + $0x90] sm:$0xff]
        %v330 = vld [vmem:[%s200 + $0x98] sm:$0xff]
        %v331 = vld [vmem:[%s200 + $0xa0] sm:$0xff]
        %v332 = vld [vmem:[%s200 + $0xa8] sm:$0xff]
        %v333 = vld [vmem:[%s200 + $0xb0] sm:$0xff]
        %v334 = vld [vmem:[%s200 + $0xb8] sm:$0xff]
        %v335 = vld [vmem:[%s200 + $0xc0] sm:$0xff]
        %v336 = vld [vmem:[%s200 + $0xc8] sm:$0xff]
        %v337 = vld [vmem:[%s200 + $0xd0] sm:$0xff]
        %v338 = vld [vmem:[%s200 + $0xd8] sm:$0xff]
        %v339 = vld [vmem:[%s200 + $0xe0] sm:$0xff]
        %v340 = vld [vmem:[%s200 + $0xe8] sm:$0xff]
        %v341 = vld [vmem:[%s200 + $0xf0] sm:$0xff]
        %v342 = vld [vmem:[%s200 + $0xf8] sm:$0xff]
        %v343 = vld [vmem:[%s210] sm:$0xff]
        %v344 = vld [vmem:[%s210 + $0x8] sm:$0xff]
        %v345 = vld [vmem:[%s210 + $0x10] sm:$0xff]
        %v346 = vld [vmem:[%s210 + $0x18] sm:$0xff]
        %v347 = vld [vmem:[%s210 + $0x20] sm:$0xff]
        %v348 = vld [vmem:[%s210 + $0x28] sm:$0xff]
        %v349 = vld [vmem:[%s210 + $0x30] sm:$0xff]
        %v350 = vld [vmem:[%s210 + $0x38] sm:$0xff]
        %v351 = vld [vmem:[%s210 + $0x40] sm:$0xff]
        %v352 = vld [vmem:[%s210 + $0x48] sm:$0xff]
        %v353 = vld [vmem:[%s210 + $0x50] sm:$0xff]
        %v354 = vld [vmem:[%s210 + $0x58] sm:$0xff]
        %v355 = vld [vmem:[%s210 + $0x60] sm:$0xff]
        %v356 = vld [vmem:[%s210 + $0x68] sm:$0xff]
        %v357 = vld [vmem:[%s210 + $0x70] sm:$0xff]
        %v358 = vld [vmem:[%s210 + $0x78] sm:$0xff]
        %v359 = vld [vmem:[%s210 + $0x80] sm:$0xff]
        %v360 = vld [vmem:[%s210 + $0x88] sm:$0xff]
        %v361 = vld [vmem:[%s210 + $0x90] sm:$0xff]
        %v362 = vld [vmem:[%s210 + $0x98] sm:$0xff]
        %v363 = vld [vmem:[%s210 + $0xa0] sm:$0xff]
        %v364 = vld [vmem:[%s210 + $0xa8] sm:$0xff]
        %v365 = vld [vmem:[%s210 + $0xb0] sm:$0xff]
        %v366 = vld [vmem:[%s210 + $0xb8] sm:$0xff]
        %v367 = vld [vmem:[%s210 + $0xc0] sm:$0xff]
        %v368 = vld [vmem:[%s210 + $0xc8] sm:$0xff]
        %v369 = vld [vmem:[%s210 + $0xd0] sm:$0xff]
        %v370 = vld [vmem:[%s210 + $0xd8] sm:$0xff]
        %v371 = vld [vmem:[%s210 + $0xe0] sm:$0xff]
        %v372 = vld [vmem:[%s210 + $0xe8] sm:$0xff]
        %v373 = vld [vmem:[%s210 + $0xf0] sm:$0xff]
        %v374 = vld [vmem:[%s210 + $0xf8] sm:$0xff]
        %v375 = vld [vmem:[%s210 + $0x100] sm:$0xff]
        %v376 = vld [vmem:[%s210 + $0x108] sm:$0xff]
        %v377 = vld [vmem:[%s210 + $0x110] sm:$0xff]
        %v378 = vld [vmem:[%s210 + $0x118] sm:$0xff]
        %v379 = vld [vmem:[%s210 + $0x120] sm:$0xff]
        %v380 = vld [vmem:[%s210 + $0x128] sm:$0xff]
        %v381 = vld [vmem:[%s210 + $0x130] sm:$0xff]
        %v382 = vld [vmem:[%s210 + $0x138] sm:$0xff]
        %v383 = vld [vmem:[%s210 + $0x140] sm:$0xff]
        %v384 = vld [vmem:[%s210 + $0x148] sm:$0xff]
        %v385 = vld [vmem:[%s210 + $0x150] sm:$0xff]
        %v386 = vld [vmem:[%s210 + $0x158] sm:$0xff]
        %v387 = vld [vmem:[%s210 + $0x160] sm:$0xff]
        %v388 = vld [vmem:[%s210 + $0x168] sm:$0xff]
        %v389 = vld [vmem:[%s210 + $0x170] sm:$0xff]
        %v390 = vld [vmem:[%s210 + $0x178] sm:$0xff]
        %v391 = vld [vmem:[%s210 + $0x180] sm:$0xff]
        %v392 = vld [vmem:[%s210 + $0x188] sm:$0xff]
        %v393 = vld [vmem:[%s210 + $0x190] sm:$0xff]
        %v394 = vld [vmem:[%s210 + $0x198] sm:$0xff]
        %v395 = vld [vmem:[%s210 + $0x1a0] sm:$0xff]
        %v396 = vld [vmem:[%s210 + $0x1a8] sm:$0xff]
        %v397 = vld [vmem:[%s210 + $0x1b0] sm:$0xff]
        %v398 = vld [vmem:[%s210 + $0x1b8] sm:$0xff]
        %v399 = vld [vmem:[%s210 + $0x1c0] sm:$0xff]
        %v400 = vld [vmem:[%s210 + $0x1c8] sm:$0xff]
        %v401 = vld [vmem:[%s210 + $0x1d0] sm:$0xff]
        %v402 = vld [vmem:[%s210 + $0x1d8] sm:$0xff]
        %v403 = vld [vmem:[%s210 + $0x1e0] sm:$0xff]
        %v404 = vld [vmem:[%s210 + $0x1e8] sm:$0xff]
        %v405 = vld [vmem:[%s210 + $0x1f0] sm:$0xff]
        %v406 = vld [vmem:[%s210 + $0x1f8] sm:$0xff]
        %v439 = vunpack.c.l.b16 %v311
        %v440 = vunpack.c.h.b16 %v311
        %v441 = vunpack.c.l.b16 %v312
        %v442 = vunpack.c.h.b16 %v312
        %v443 = vunpack.c.l.b16 %v313
        %v444 = vunpack.c.h.b16 %v313
        %v445 = vunpack.c.l.b16 %v314
        %v446 = vunpack.c.h.b16 %v314
        %v447 = vunpack.c.l.b16 %v315
        %v448 = vunpack.c.h.b16 %v315
        %v449 = vunpack.c.l.b16 %v316
        %v450 = vunpack.c.h.b16 %v316
        %v451 = vunpack.c.l.b16 %v317
        %v452 = vunpack.c.h.b16 %v317
        %v453 = vunpack.c.l.b16 %v318
        %v454 = vunpack.c.h.b16 %v318
        %v455 = vunpack.c.l.b16 %v319
        %v456 = vunpack.c.h.b16 %v319
        %v457 = vunpack.c.l.b16 %v320
        %v458 = vunpack.c.h.b16 %v320
        %v459 = vunpack.c.l.b16 %v321
        %v460 = vunpack.c.h.b16 %v321
        %v461 = vunpack.c.l.b16 %v322
        %v462 = vunpack.c.h.b16 %v322
        %v463 = vunpack.c.l.b16 %v323
        %v464 = vunpack.c.h.b16 %v323
        %v465 = vunpack.c.l.b16 %v324
        %v466 = vunpack.c.h.b16 %v324
        %v467 = vunpack.c.l.b16 %v325
        %v468 = vunpack.c.h.b16 %v325
        %v469 = vunpack.c.l.b16 %v326
        %v470 = vunpack.c.h.b16 %v326
        %v471 = vunpack.c.l.b16 %v327
        %v472 = vunpack.c.h.b16 %v327
        %v473 = vunpack.c.l.b16 %v328
        %v474 = vunpack.c.h.b16 %v328
        %v475 = vunpack.c.l.b16 %v329
        %v476 = vunpack.c.h.b16 %v329
        %v477 = vunpack.c.l.b16 %v330
        %v478 = vunpack.c.h.b16 %v330
        %v479 = vunpack.c.l.b16 %v331
        %v480 = vunpack.c.h.b16 %v331
        %v481 = vunpack.c.l.b16 %v332
        %v482 = vunpack.c.h.b16 %v332
        %v483 = vunpack.c.l.b16 %v333
        %v484 = vunpack.c.h.b16 %v333
        %v485 = vunpack.c.l.b16 %v334
        %v486 = vunpack.c.h.b16 %v334
        %v487 = vunpack.c.l.b16 %v335
        %v488 = vunpack.c.h.b16 %v335
        %v489 = vunpack.c.l.b16 %v336
        %v490 = vunpack.c.h.b16 %v336
        %v491 = vunpack.c.l.b16 %v337
        %v492 = vunpack.c.h.b16 %v337
        %v493 = vunpack.c.l.b16 %v338
        %v494 = vunpack.c.h.b16 %v338
        %v495 = vunpack.c.l.b16 %v339
        %v496 = vunpack.c.h.b16 %v339
        %v497 = vunpack.c.l.b16 %v340
        %v498 = vunpack.c.h.b16 %v340
        %v499 = vunpack.c.l.b16 %v341
        %v500 = vunpack.c.h.b16 %v341
        %v501 = vunpack.c.l.b16 %v342
        %v502 = vunpack.c.h.b16 %v342
        %v503 = vpack.c.b16 %v443, %v439
        %v504 = vpack.c.b16 %v444, %v440
        %v505 = vpack.c.b16 %v445, %v441
        %v506 = vpack.c.b16 %v446, %v442
        %v507 = vpack.c.b16 %v451, %v447
        %v508 = vpack.c.b16 %v452, %v448
        %v509 = vpack.c.b16 %v453, %v449
        %v510 = vpack.c.b16 %v454, %v450
        %v511 = vpack.c.b16 %v459, %v455
        %v512 = vpack.c.b16 %v460, %v456
        %v513 = vpack.c.b16 %v461, %v457
        %v514 = vpack.c.b16 %v462, %v458
        %v515 = vpack.c.b16 %v467, %v463
        %v516 = vpack.c.b16 %v468, %v464
        %v517 = vpack.c.b16 %v469, %v465
        %v518 = vpack.c.b16 %v470, %v466
        %v519 = vpack.c.b16 %v475, %v471
        %v520 = vpack.c.b16 %v476, %v472
        %v521 = vpack.c.b16 %v477, %v473
        %v522 = vpack.c.b16 %v478, %v474
        %v523 = vpack.c.b16 %v483, %v479
        %v524 = vpack.c.b16 %v484, %v480
        %v525 = vpack.c.b16 %v485, %v481
        %v526 = vpack.c.b16 %v486, %v482
        %v527 = vpack.c.b16 %v491, %v487
        %v528 = vpack.c.b16 %v492, %v488
        %v529 = vpack.c.b16 %v493, %v489
        %v530 = vpack.c.b16 %v494, %v490
        %v531 = vpack.c.b16 %v499, %v495
        %v532 = vpack.c.b16 %v500, %v496
        %v533 = vpack.c.b16 %v501, %v497
        %v534 = vpack.c.b16 %v502, %v498
        %v631 = vunpack.c.l.b16 %v343
        %v632 = vunpack.c.h.b16 %v343
        %v633 = vunpack.c.l.b16 %v344
        %v634 = vunpack.c.h.b16 %v344
        %v635 = vunpack.c.l.b16 %v345
        %v636 = vunpack.c.h.b16 %v345
        %v637 = vunpack.c.l.b16 %v346
        %v638 = vunpack.c.h.b16 %v346
        %v639 = vunpack.c.l.b16 %v347
        %v640 = vunpack.c.h.b16 %v347
        %v641 = vunpack.c.l.b16 %v348
        %v642 = vunpack.c.h.b16 %v348
        %v643 = vunpack.c.l.b16 %v349
        %v644 = vunpack.c.h.b16 %v349
        %v645 = vunpack.c.l.b16 %v350
        %v646 = vunpack.c.h.b16 %v350
        %v647 = vunpack.c.l.b16 %v351
        %v648 = vunpack.c.h.b16 %v351
        %v649 = vunpack.c.l.b16 %v352
        %v650 = vunpack.c.h.b16 %v352
        %v651 = vunpack.c.l.b16 %v353
        %v652 = vunpack.c.h.b16 %v353
        %v653 = vunpack.c.l.b16 %v354
        %v654 = vunpack.c.h.b16 %v354
        %v655 = vunpack.c.l.b16 %v355
        %v656 = vunpack.c.h.b16 %v355
        %v657 = vunpack.c.l.b16 %v356
        %v658 = vunpack.c.h.b16 %v356
        %v659 = vunpack.c.l.b16 %v357
        %v660 = vunpack.c.h.b16 %v357
        %v661 = vunpack.c.l.b16 %v358
        %v662 = vunpack.c.h.b16 %v358
        %v663 = vunpack.c.l.b16 %v359
        %v664 = vunpack.c.h.b16 %v359
        %v665 = vunpack.c.l.b16 %v360
        %v666 = vunpack.c.h.b16 %v360
        %v667 = vunpack.c.l.b16 %v361
        %v668 = vunpack.c.h.b16 %v361
        %v669 = vunpack.c.l.b16 %v362
        %v670 = vunpack.c.h.b16 %v362
        %v671 = vunpack.c.l.b16 %v363
        %v672 = vunpack.c.h.b16 %v363
        %v673 = vunpack.c.l.b16 %v364
        %v674 = vunpack.c.h.b16 %v364
        %v675 = vunpack.c.l.b16 %v365
        %v676 = vunpack.c.h.b16 %v365
        %v677 = vunpack.c.l.b16 %v366
        %v678 = vunpack.c.h.b16 %v366
        %v679 = vunpack.c.l.b16 %v367
        %v680 = vunpack.c.h.b16 %v367
        %v681 = vunpack.c.l.b16 %v368
        %v682 = vunpack.c.h.b16 %v368
        %v683 = vunpack.c.l.b16 %v369
        %v684 = vunpack.c.h.b16 %v369
        %v685 = vunpack.c.l.b16 %v370
        %v686 = vunpack.c.h.b16 %v370
        %v687 = vunpack.c.l.b16 %v371
        %v688 = vunpack.c.h.b16 %v371
        %v689 = vunpack.c.l.b16 %v372
        %v690 = vunpack.c.h.b16 %v372
        %v691 = vunpack.c.l.b16 %v373
        %v692 = vunpack.c.h.b16 %v373
        %v693 = vunpack.c.l.b16 %v374
        %v694 = vunpack.c.h.b16 %v374
        %v695 = vunpack.c.l.b16 %v375
        %v696 = vunpack.c.h.b16 %v375
        %v697 = vunpack.c.l.b16 %v376
        %v698 = vunpack.c.h.b16 %v376
        %v699 = vunpack.c.l.b16 %v377
        %v700 = vunpack.c.h.b16 %v377
        %v701 = vunpack.c.l.b16 %v378
        %v702 = vunpack.c.h.b16 %v378
        %v703 = vunpack.c.l.b16 %v379
        %v704 = vunpack.c.h.b16 %v379
        %v705 = vunpack.c.l.b16 %v380
        %v706 = vunpack.c.h.b16 %v380
        %v707 = vunpack.c.l.b16 %v381
        %v708 = vunpack.c.h.b16 %v381
        %v709 = vunpack.c.l.b16 %v382
        %v710 = vunpack.c.h.b16 %v382
        %v711 = vunpack.c.l.b16 %v383
        %v712 = vunpack.c.h.b16 %v383
        %v713 = vunpack.c.l.b16 %v384
        %v714 = vunpack.c.h.b16 %v384
        %v715 = vunpack.c.l.b16 %v385
        %v716 = vunpack.c.h.b16 %v385
        %v717 = vunpack.c.l.b16 %v386
        %v718 = vunpack.c.h.b16 %v386
        %v719 = vunpack.c.l.b16 %v387
        %v720 = vunpack.c.h.b16 %v387
        %v721 = vunpack.c.l.b16 %v388
        %v722 = vunpack.c.h.b16 %v388
        %v723 = vunpack.c.l.b16 %v389
        %v724 = vunpack.c.h.b16 %v389
        %v725 = vunpack.c.l.b16 %v390
        %v726 = vunpack.c.h.b16 %v390
        %v727 = vunpack.c.l.b16 %v391
        %v728 = vunpack.c.h.b16 %v391
        %v729 = vunpack.c.l.b16 %v392
        %v730 = vunpack.c.h.b16 %v392
        %v731 = vunpack.c.l.b16 %v393
        %v732 = vunpack.c.h.b16 %v393
        %v733 = vunpack.c.l.b16 %v394
        %v734 = vunpack.c.h.b16 %v394
        %v735 = vunpack.c.l.b16 %v395
        %v736 = vunpack.c.h.b16 %v395
        %v737 = vunpack.c.l.b16 %v396
        %v738 = vunpack.c.h.b16 %v396
        %v739 = vunpack.c.l.b16 %v397
        %v740 = vunpack.c.h.b16 %v397
        %v741 = vunpack.c.l.b16 %v398
        %v742 = vunpack.c.h.b16 %v398
        %v743 = vunpack.c.l.b16 %v399
        %v744 = vunpack.c.h.b16 %v399
        %v745 = vunpack.c.l.b16 %v400
        %v746 = vunpack.c.h.b16 %v400
        %v747 = vunpack.c.l.b16 %v401
        %v748 = vunpack.c.h.b16 %v401
        %v749 = vunpack.c.l.b16 %v402
        %v750 = vunpack.c.h.b16 %v402
        %v751 = vunpack.c.l.b16 %v403
        %v752 = vunpack.c.h.b16 %v403
        %v753 = vunpack.c.l.b16 %v404
        %v754 = vunpack.c.h.b16 %v404
        %v755 = vunpack.c.l.b16 %v405
        %v756 = vunpack.c.h.b16 %v405
        %v757 = vunpack.c.l.b16 %v406
        %v758 = vunpack.c.h.b16 %v406
        %v759 = vpack.c.b16 %v633, %v631
        %v760 = vpack.c.b16 %v634, %v632
        %v761 = vpack.c.b16 %v637, %v635
        %v762 = vpack.c.b16 %v638, %v636
        %v763 = vpack.c.b16 %v641, %v639
        %v764 = vpack.c.b16 %v642, %v640
        %v765 = vpack.c.b16 %v645, %v643
        %v766 = vpack.c.b16 %v646, %v644
        %v767 = vpack.c.b16 %v649, %v647
        %v768 = vpack.c.b16 %v650, %v648
        %v769 = vpack.c.b16 %v653, %v651
        %v770 = vpack.c.b16 %v654, %v652
        %v771 = vpack.c.b16 %v657, %v655
        %v772 = vpack.c.b16 %v658, %v656
        %v773 = vpack.c.b16 %v661, %v659
        %v774 = vpack.c.b16 %v662, %v660
        %v775 = vpack.c.b16 %v665, %v663
        %v776 = vpack.c.b16 %v666, %v664
        %v777 = vpack.c.b16 %v669, %v667
        %v778 = vpack.c.b16 %v670, %v668
        %v779 = vpack.c.b16 %v673, %v671
        %v780 = vpack.c.b16 %v674, %v672
        %v781 = vpack.c.b16 %v677, %v675
        %v782 = vpack.c.b16 %v678, %v676
        %v783 = vpack.c.b16 %v681, %v679
        %v784 = vpack.c.b16 %v682, %v680
        %v785 = vpack.c.b16 %v685, %v683
        %v786 = vpack.c.b16 %v686, %v684
        %v787 = vpack.c.b16 %v689, %v687
        %v788 = vpack.c.b16 %v690, %v688
        %v789 = vpack.c.b16 %v693, %v691
        %v790 = vpack.c.b16 %v694, %v692
        %v791 = vpack.c.b16 %v697, %v695
        %v792 = vpack.c.b16 %v698, %v696
        %v793 = vpack.c.b16 %v701, %v699
        %v794 = vpack.c.b16 %v702, %v700
        %v795 = vpack.c.b16 %v705, %v703
        %v796 = vpack.c.b16 %v706, %v704
        %v797 = vpack.c.b16 %v709, %v707
        %v798 = vpack.c.b16 %v710, %v708
        %v799 = vpack.c.b16 %v713, %v711
        %v800 = vpack.c.b16 %v714, %v712
        %v801 = vpack.c.b16 %v717, %v715
        %v802 = vpack.c.b16 %v718, %v716
        %v803 = vpack.c.b16 %v721, %v719
        %v804 = vpack.c.b16 %v722, %v720
        %v805 = vpack.c.b16 %v725, %v723
        %v806 = vpack.c.b16 %v726, %v724
        %v807 = vpack.c.b16 %v729, %v727
        %v808 = vpack.c.b16 %v730, %v728
        %v809 = vpack.c.b16 %v733, %v731
        %v810 = vpack.c.b16 %v734, %v732
        %v811 = vpack.c.b16 %v737, %v735
        %v812 = vpack.c.b16 %v738, %v736
        %v813 = vpack.c.b16 %v741, %v739
        %v814 = vpack.c.b16 %v742, %v740
        %v815 = vpack.c.b16 %v745, %v743
        %v816 = vpack.c.b16 %v746, %v744
        %v817 = vpack.c.b16 %v749, %v747
        %v818 = vpack.c.b16 %v750, %v748
        %v819 = vpack.c.b16 %v753, %v751
        %v820 = vpack.c.b16 %v754, %v752
        %v821 = vpack.c.b16 %v757, %v755
        %v822 = vpack.c.b16 %v758, %v756
        %887 = vmatpush.bf16.msra.mxu0 %v773
        %888 = vmatpush.bf16.msra.mxu0 %v771
        %889 = vmatpush.bf16.msra.mxu0 %v769
        %890 = vmatpush.bf16.msra.mxu0 %v767
        %891 = vmatpush.bf16.msra.mxu0 %v765
        %892 = vmatpush.bf16.msra.mxu0 %v763
        %893 = vmatpush.bf16.msra.mxu0 %v761
        %894 = vmatpush.bf16.msra.mxu0 %v759
        %895 = vmatmul.bf16.gmra.mxu0 %v503
        %v896 = vpop.f32.mrf.mxu0
        %v897 = vadd.f32 0.0, %v896
        %v898 = vpop.f32.mrf.mxu0
        %v899 = vadd.f32 0.0, %v898
        %900 = vmatmul.bf16.gmra.mxu0 %v507
        %v901 = vpop.f32.mrf.mxu0
        %v902 = vadd.f32 0.0, %v901
        %v903 = vpop.f32.mrf.mxu0
        %v904 = vadd.f32 0.0, %v903
        %905 = vmatmul.bf16.gmra.mxu0 %v511
        %v906 = vpop.f32.mrf.mxu0
        %v907 = vadd.f32 0.0, %v906
        %v908 = vpop.f32.mrf.mxu0
        %v909 = vadd.f32 0.0, %v908
        %910 = vmatmul.bf16.gmra.mxu0 %v515
        %v911 = vpop.f32.mrf.mxu0
        %v912 = vadd.f32 0.0, %v911
        %v913 = vpop.f32.mrf.mxu0
        %v914 = vadd.f32 0.0, %v913
        %915 = vmatmul.bf16.gmra.mxu0 %v519
        %v916 = vpop.f32.mrf.mxu0
        %v917 = vadd.f32 0.0, %v916
        %v918 = vpop.f32.mrf.mxu0
        %v919 = vadd.f32 0.0, %v918
        %920 = vmatmul.bf16.gmra.mxu0 %v523
        %v921 = vpop.f32.mrf.mxu0
        %v922 = vadd.f32 0.0, %v921
        %v923 = vpop.f32.mrf.mxu0
        %v924 = vadd.f32 0.0, %v923
        %925 = vmatmul.bf16.gmra.mxu0 %v527
        %v926 = vpop.f32.mrf.mxu0
        %v927 = vadd.f32 0.0, %v926
        %v928 = vpop.f32.mrf.mxu0
        %v929 = vadd.f32 0.0, %v928
        %930 = vmatmul.bf16.gmra.mxu0 %v531
        %v931 = vpop.f32.mrf.mxu0
        %v932 = vadd.f32 0.0, %v931
        %v933 = vpop.f32.mrf.mxu0
        %v934 = vadd.f32 0.0, %v933
        %935 = vdwg.mxu0
        %936 = vmatpush.bf16.msra.mxu0 %v789
        %937 = vmatpush.bf16.msra.mxu0 %v787
        %938 = vmatpush.bf16.msra.mxu0 %v785
        %939 = vmatpush.bf16.msra.mxu0 %v783
        %940 = vmatpush.bf16.msra.mxu0 %v781
        %941 = vmatpush.bf16.msra.mxu0 %v779
        %942 = vmatpush.bf16.msra.mxu0 %v777
        %943 = vmatpush.bf16.msra.mxu0 %v775
        %944 = vmatmul.bf16.gmra.mxu0 %v504
        %v945 = vpop.f32.mrf.mxu0
        %v946 = vadd.f32 %v897, %v945
        %v947 = vpop.f32.mrf.mxu0
        %v948 = vadd.f32 %v899, %v947
        %949 = vmatmul.bf16.gmra.mxu0 %v508
        %v950 = vpop.f32.mrf.mxu0
        %v951 = vadd.f32 %v902, %v950
        %v952 = vpop.f32.mrf.mxu0
        %v953 = vadd.f32 %v904, %v952
        %954 = vmatmul.bf16.gmra.mxu0 %v512
        %v955 = vpop.f32.mrf.mxu0
        %v956 = vadd.f32 %v907, %v955
        %v957 = vpop.f32.mrf.mxu0
        %v958 = vadd.f32 %v909, %v957
        %959 = vmatmul.bf16.gmra.mxu0 %v516
        %v960 = vpop.f32.mrf.mxu0
        %v961 = vadd.f32 %v912, %v960
        %v962 = vpop.f32.mrf.mxu0
        %v963 = vadd.f32 %v914, %v962
        %964 = vmatmul.bf16.gmra.mxu0 %v520
        %v965 = vpop.f32.mrf.mxu0
        %v966 = vadd.f32 %v917, %v965
        %v967 = vpop.f32.mrf.mxu0
        %v968 = vadd.f32 %v919, %v967
        %969 = vmatmul.bf16.gmra.mxu0 %v524
        %v970 = vpop.f32.mrf.mxu0
        %v971 = vadd.f32 %v922, %v970
        %v972 = vpop.f32.mrf.mxu0
        %v973 = vadd.f32 %v924, %v972
        %974 = vmatmul.bf16.gmra.mxu0 %v528
        %v975 = vpop.f32.mrf.mxu0
        %v976 = vadd.f32 %v927, %v975
        %v977 = vpop.f32.mrf.mxu0
        %v978 = vadd.f32 %v929, %v977
        %979 = vmatmul.bf16.gmra.mxu0 %v532
        %v980 = vpop.f32.mrf.mxu0
        %v981 = vadd.f32 %v932, %v980
        %v982 = vpop.f32.mrf.mxu0
        %v983 = vadd.f32 %v934, %v982
        %984 = vdwg.mxu0
        %985 = vmatpush.bf16.msra.mxu0 %v805
        %986 = vmatpush.bf16.msra.mxu0 %v803
        %987 = vmatpush.bf16.msra.mxu0 %v801
        %988 = vmatpush.bf16.msra.mxu0 %v799
        %989 = vmatpush.bf16.msra.mxu0 %v797
        %990 = vmatpush.bf16.msra.mxu0 %v795
        %991 = vmatpush.bf16.msra.mxu0 %v793
        %992 = vmatpush.bf16.msra.mxu0 %v791
        %993 = vmatmul.bf16.gmra.mxu0 %v505
        %v994 = vpop.f32.mrf.mxu0
        %v995 = vadd.f32 %v946, %v994
        %v996 = vpop.f32.mrf.mxu0
        %v997 = vadd.f32 %v948, %v996
        %998 = vmatmul.bf16.gmra.mxu0 %v509
        %v999 = vpop.f32.mrf.mxu0
        %v1000 = vadd.f32 %v951, %v999
        %v1001 = vpop.f32.mrf.mxu0
        %v1002 = vadd.f32 %v953, %v1001
        %1003 = vmatmul.bf16.gmra.mxu0 %v513
        %v1004 = vpop.f32.mrf.mxu0
        %v1005 = vadd.f32 %v956, %v1004
        %v1006 = vpop.f32.mrf.mxu0
        %v1007 = vadd.f32 %v958, %v1006
        %1008 = vmatmul.bf16.gmra.mxu0 %v517
        %v1009 = vpop.f32.mrf.mxu0
        %v1010 = vadd.f32 %v961, %v1009
        %v1011 = vpop.f32.mrf.mxu0
        %v1012 = vadd.f32 %v963, %v1011
        %1013 = vmatmul.bf16.gmra.mxu0 %v521
        %v1014 = vpop.f32.mrf.mxu0
        %v1015 = vadd.f32 %v966, %v1014
        %v1016 = vpop.f32.mrf.mxu0
        %v1017 = vadd.f32 %v968, %v1016
        %1018 = vmatmul.bf16.gmra.mxu0 %v525
        %v1019 = vpop.f32.mrf.mxu0
        %v1020 = vadd.f32 %v971, %v1019
        %v1021 = vpop.f32.mrf.mxu0
        %v1022 = vadd.f32 %v973, %v1021
        %1023 = vmatmul.bf16.gmra.mxu0 %v529
        %v1024 = vpop.f32.mrf.mxu0
        %v1025 = vadd.f32 %v976, %v1024
        %v1026 = vpop.f32.mrf.mxu0
        %v1027 = vadd.f32 %v978, %v1026
        %1028 = vmatmul.bf16.gmra.mxu0 %v533
        %v1029 = vpop.f32.mrf.mxu0
        %v1030 = vadd.f32 %v981, %v1029
        %v1031 = vpop.f32.mrf.mxu0
        %v1032 = vadd.f32 %v983, %v1031
        %1033 = vdwg.mxu0
        %1034 = vmatpush.bf16.msra.mxu0 %v821
        %1035 = vmatpush.bf16.msra.mxu0 %v819
        %1036 = vmatpush.bf16.msra.mxu0 %v817
        %1037 = vmatpush.bf16.msra.mxu0 %v815
        %1038 = vmatpush.bf16.msra.mxu0 %v813
        %1039 = vmatpush.bf16.msra.mxu0 %v811
        %1040 = vmatpush.bf16.msra.mxu0 %v809
        %1041 = vmatpush.bf16.msra.mxu0 %v807
        %1042 = vmatmul.bf16.gmra.mxu0 %v506
        %v1043 = vpop.f32.mrf.mxu0
        %v1044 = vadd.f32 %v995, %v1043
        %v1045 = vpop.f32.mrf.mxu0
        %v1046 = vadd.f32 %v997, %v1045
        %1047 = vmatmul.bf16.gmra.mxu0 %v510
        %v1048 = vpop.f32.mrf.mxu0
        %v1049 = vadd.f32 %v1000, %v1048
        %v1050 = vpop.f32.mrf.mxu0
        %v1051 = vadd.f32 %v1002, %v1050
        %1052 = vmatmul.bf16.gmra.mxu0 %v514
        %v1053 = vpop.f32.mrf.mxu0
        %v1054 = vadd.f32 %v1005, %v1053
        %v1055 = vpop.f32.mrf.mxu0
        %v1056 = vadd.f32 %v1007, %v1055
        %1057 = vmatmul.bf16.gmra.mxu0 %v518
        %v1058 = vpop.f32.mrf.mxu0
        %v1059 = vadd.f32 %v1010, %v1058
        %v1060 = vpop.f32.mrf.mxu0
        %v1061 = vadd.f32 %v1012, %v1060
        %1062 = vmatmul.bf16.gmra.mxu0 %v522
        %v1063 = vpop.f32.mrf.mxu0
        %v1064 = vadd.f32 %v1015, %v1063
        %v1065 = vpop.f32.mrf.mxu0
        %v1066 = vadd.f32 %v1017, %v1065
        %1067 = vmatmul.bf16.gmra.mxu0 %v526
        %v1068 = vpop.f32.mrf.mxu0
        %v1069 = vadd.f32 %v1020, %v1068
        %v1070 = vpop.f32.mrf.mxu0
        %v1071 = vadd.f32 %v1022, %v1070
        %1072 = vmatmul.bf16.gmra.mxu0 %v530
        %v1073 = vpop.f32.mrf.mxu0
        %v1074 = vadd.f32 %v1025, %v1073
        %v1075 = vpop.f32.mrf.mxu0
        %v1076 = vadd.f32 %v1027, %v1075
        %1077 = vmatmul.bf16.gmra.mxu0 %v534
        %v1078 = vpop.f32.mrf.mxu0
        %v1079 = vadd.f32 %v1030, %v1078
        %v1080 = vpop.f32.mrf.mxu0
        %v1081 = vadd.f32 %v1032, %v1080
        %1082 = vdwg.mxu0
        %1083 = vmatpush.bf16.msra.mxu0 %v774
        %1084 = vmatpush.bf16.msra.mxu0 %v772
        %1085 = vmatpush.bf16.msra.mxu0 %v770
        %1086 = vmatpush.bf16.msra.mxu0 %v768
        %1087 = vmatpush.bf16.msra.mxu0 %v766
        %1088 = vmatpush.bf16.msra.mxu0 %v764
        %1089 = vmatpush.bf16.msra.mxu0 %v762
        %1090 = vmatpush.bf16.msra.mxu0 %v760
        %1091 = vmatmul.bf16.gmra.mxu0 %v503
        %v1092 = vpop.f32.mrf.mxu0
        %v1093 = vadd.f32 0.0, %v1092
        %v1094 = vpop.f32.mrf.mxu0
        %v1095 = vadd.f32 0.0, %v1094
        %1096 = vmatmul.bf16.gmra.mxu0 %v507
        %v1097 = vpop.f32.mrf.mxu0
        %v1098 = vadd.f32 0.0, %v1097
        %v1099 = vpop.f32.mrf.mxu0
        %v1100 = vadd.f32 0.0, %v1099
        %1101 = vmatmul.bf16.gmra.mxu0 %v511
        %v1102 = vpop.f32.mrf.mxu0
        %v1103 = vadd.f32 0.0, %v1102
        %v1104 = vpop.f32.mrf.mxu0
        %v1105 = vadd.f32 0.0, %v1104
        %1106 = vmatmul.bf16.gmra.mxu0 %v515
        %v1107 = vpop.f32.mrf.mxu0
        %v1108 = vadd.f32 0.0, %v1107
        %v1109 = vpop.f32.mrf.mxu0
        %v1110 = vadd.f32 0.0, %v1109
        %1111 = vmatmul.bf16.gmra.mxu0 %v519
        %v1112 = vpop.f32.mrf.mxu0
        %v1113 = vadd.f32 0.0, %v1112
        %v1114 = vpop.f32.mrf.mxu0
        %v1115 = vadd.f32 0.0, %v1114
        %1116 = vmatmul.bf16.gmra.mxu0 %v523
        %v1117 = vpop.f32.mrf.mxu0
        %v1118 = vadd.f32 0.0, %v1117
        %v1119 = vpop.f32.mrf.mxu0
        %v1120 = vadd.f32 0.0, %v1119
        %1121 = vmatmul.bf16.gmra.mxu0 %v527
        %v1122 = vpop.f32.mrf.mxu0
        %v1123 = vadd.f32 0.0, %v1122
        %v1124 = vpop.f32.mrf.mxu0
        %v1125 = vadd.f32 0.0, %v1124
        %1126 = vmatmul.bf16.gmra.mxu0 %v531
        %v1127 = vpop.f32.mrf.mxu0
        %v1128 = vadd.f32 0.0, %v1127
        %v1129 = vpop.f32.mrf.mxu0
        %v1130 = vadd.f32 0.0, %v1129
        %1131 = vdwg.mxu0
        %1132 = vmatpush.bf16.msra.mxu0 %v790
        %1133 = vmatpush.bf16.msra.mxu0 %v788
        %1134 = vmatpush.bf16.msra.mxu0 %v786
        %1135 = vmatpush.bf16.msra.mxu0 %v784
        %1136 = vmatpush.bf16.msra.mxu0 %v782
        %1137 = vmatpush.bf16.msra.mxu0 %v780
        %1138 = vmatpush.bf16.msra.mxu0 %v778
        %1139 = vmatpush.bf16.msra.mxu0 %v776
        %1140 = vmatmul.bf16.gmra.mxu0 %v504
        %v1141 = vpop.f32.mrf.mxu0
        %v1142 = vadd.f32 %v1093, %v1141
        %v1143 = vpop.f32.mrf.mxu0
        %v1144 = vadd.f32 %v1095, %v1143
        %1145 = vmatmul.bf16.gmra.mxu0 %v508
        %v1146 = vpop.f32.mrf.mxu0
        %v1147 = vadd.f32 %v1098, %v1146
        %v1148 = vpop.f32.mrf.mxu0
        %v1149 = vadd.f32 %v1100, %v1148
        %1150 = vmatmul.bf16.gmra.mxu0 %v512
        %v1151 = vpop.f32.mrf.mxu0
        %v1152 = vadd.f32 %v1103, %v1151
        %v1153 = vpop.f32.mrf.mxu0
        %v1154 = vadd.f32 %v1105, %v1153
        %1155 = vmatmul.bf16.gmra.mxu0 %v516
        %v1156 = vpop.f32.mrf.mxu0
        %v1157 = vadd.f32 %v1108, %v1156
        %v1158 = vpop.f32.mrf.mxu0
        %v1159 = vadd.f32 %v1110, %v1158
        %1160 = vmatmul.bf16.gmra.mxu0 %v520
        %v1161 = vpop.f32.mrf.mxu0
        %v1162 = vadd.f32 %v1113, %v1161
        %v1163 = vpop.f32.mrf.mxu0
        %v1164 = vadd.f32 %v1115, %v1163
        %1165 = vmatmul.bf16.gmra.mxu0 %v524
        %v1166 = vpop.f32.mrf.mxu0
        %v1167 = vadd.f32 %v1118, %v1166
        %v1168 = vpop.f32.mrf.mxu0
        %v1169 = vadd.f32 %v1120, %v1168
        %1170 = vmatmul.bf16.gmra.mxu0 %v528
        %v1171 = vpop.f32.mrf.mxu0
        %v1172 = vadd.f32 %v1123, %v1171
        %v1173 = vpop.f32.mrf.mxu0
        %v1174 = vadd.f32 %v1125, %v1173
        %1175 = vmatmul.bf16.gmra.mxu0 %v532
        %v1176 = vpop.f32.mrf.mxu0
        %v1177 = vadd.f32 %v1128, %v1176
        %v1178 = vpop.f32.mrf.mxu0
        %v1179 = vadd.f32 %v1130, %v1178
        %1180 = vdwg.mxu0
        %1181 = vmatpush.bf16.msra.mxu0 %v806
        %1182 = vmatpush.bf16.msra.mxu0 %v804
        %1183 = vmatpush.bf16.msra.mxu0 %v802
        %1184 = vmatpush.bf16.msra.mxu0 %v800
        %1185 = vmatpush.bf16.msra.mxu0 %v798
        %1186 = vmatpush.bf16.msra.mxu0 %v796
        %1187 = vmatpush.bf16.msra.mxu0 %v794
        %1188 = vmatpush.bf16.msra.mxu0 %v792
        %1189 = vmatmul.bf16.gmra.mxu0 %v505
        %v1190 = vpop.f32.mrf.mxu0
        %v1191 = vadd.f32 %v1142, %v1190
        %v1192 = vpop.f32.mrf.mxu0
        %v1193 = vadd.f32 %v1144, %v1192
        %1194 = vmatmul.bf16.gmra.mxu0 %v509
        %v1195 = vpop.f32.mrf.mxu0
        %v1196 = vadd.f32 %v1147, %v1195
        %v1197 = vpop.f32.mrf.mxu0
        %v1198 = vadd.f32 %v1149, %v1197
        %1199 = vmatmul.bf16.gmra.mxu0 %v513
        %v1200 = vpop.f32.mrf.mxu0
        %v1201 = vadd.f32 %v1152, %v1200
        %v1202 = vpop.f32.mrf.mxu0
        %v1203 = vadd.f32 %v1154, %v1202
        %1204 = vmatmul.bf16.gmra.mxu0 %v517
        %v1205 = vpop.f32.mrf.mxu0
        %v1206 = vadd.f32 %v1157, %v1205
        %v1207 = vpop.f32.mrf.mxu0
        %v1208 = vadd.f32 %v1159, %v1207
        %1209 = vmatmul.bf16.gmra.mxu0 %v521
        %v1210 = vpop.f32.mrf.mxu0
        %v1211 = vadd.f32 %v1162, %v1210
        %v1212 = vpop.f32.mrf.mxu0
        %v1213 = vadd.f32 %v1164, %v1212
        %1214 = vmatmul.bf16.gmra.mxu0 %v525
        %v1215 = vpop.f32.mrf.mxu0
        %v1216 = vadd.f32 %v1167, %v1215
        %v1217 = vpop.f32.mrf.mxu0
        %v1218 = vadd.f32 %v1169, %v1217
        %1219 = vmatmul.bf16.gmra.mxu0 %v529
        %v1220 = vpop.f32.mrf.mxu0
        %v1221 = vadd.f32 %v1172, %v1220
        %v1222 = vpop.f32.mrf.mxu0
        %v1223 = vadd.f32 %v1174, %v1222
        %1224 = vmatmul.bf16.gmra.mxu0 %v533
        %v1225 = vpop.f32.mrf.mxu0
        %v1226 = vadd.f32 %v1177, %v1225
        %v1227 = vpop.f32.mrf.mxu0
        %v1228 = vadd.f32 %v1179, %v1227
        %1229 = vdwg.mxu0
        %1230 = vmatpush.bf16.msra.mxu0 %v822
        %1231 = vmatpush.bf16.msra.mxu0 %v820
        %1232 = vmatpush.bf16.msra.mxu0 %v818
        %1233 = vmatpush.bf16.msra.mxu0 %v816
        %1234 = vmatpush.bf16.msra.mxu0 %v814
        %1235 = vmatpush.bf16.msra.mxu0 %v812
        %1236 = vmatpush.bf16.msra.mxu0 %v810
        %1237 = vmatpush.bf16.msra.mxu0 %v808
        %1238 = vmatmul.bf16.gmra.mxu0 %v506
        %v1239 = vpop.f32.mrf.mxu0
        %v1240 = vadd.f32 %v1191, %v1239
        %v1241 = vpop.f32.mrf.mxu0
        %v1242 = vadd.f32 %v1193, %v1241
        %1243 = vmatmul.bf16.gmra.mxu0 %v510
        %v1244 = vpop.f32.mrf.mxu0
        %v1245 = vadd.f32 %v1196, %v1244
        %v1246 = vpop.f32.mrf.mxu0
        %v1247 = vadd.f32 %v1198, %v1246
        %1248 = vmatmul.bf16.gmra.mxu0 %v514
        %v1249 = vpop.f32.mrf.mxu0
        %v1250 = vadd.f32 %v1201, %v1249
        %v1251 = vpop.f32.mrf.mxu0
        %v1252 = vadd.f32 %v1203, %v1251
        %1253 = vmatmul.bf16.gmra.mxu0 %v518
        %v1254 = vpop.f32.mrf.mxu0
        %v1255 = vadd.f32 %v1206, %v1254
        %v1256 = vpop.f32.mrf.mxu0
        %v1257 = vadd.f32 %v1208, %v1256
        %1258 = vmatmul.bf16.gmra.mxu0 %v522
        %v1259 = vpop.f32.mrf.mxu0
        %v1260 = vadd.f32 %v1211, %v1259
        %v1261 = vpop.f32.mrf.mxu0
        %v1262 = vadd.f32 %v1213, %v1261
        %1263 = vmatmul.bf16.gmra.mxu0 %v526
        %v1264 = vpop.f32.mrf.mxu0
        %v1265 = vadd.f32 %v1216, %v1264
        %v1266 = vpop.f32.mrf.mxu0
        %v1267 = vadd.f32 %v1218, %v1266
        %1268 = vmatmul.bf16.gmra.mxu0 %v530
        %v1269 = vpop.f32.mrf.mxu0
        %v1270 = vadd.f32 %v1221, %v1269
        %v1271 = vpop.f32.mrf.mxu0
        %v1272 = vadd.f32 %v1223, %v1271
        %1273 = vmatmul.bf16.gmra.mxu0 %v534
        %v1274 = vpop.f32.mrf.mxu0
        %v1275 = vadd.f32 %v1226, %v1274
        %v1276 = vpop.f32.mrf.mxu0
        %v1277 = vadd.f32 %v1228, %v1276
        %1278 = vdwg.mxu0
        %v1279 = vadd.f32 %v279, %v1044
        %v1280 = vadd.f32 %v280, %v1240
        %v1281 = vadd.f32 %v281, %v1046
        %v1282 = vadd.f32 %v282, %v1242
        %v1283 = vadd.f32 %v283, %v1049
        %v1284 = vadd.f32 %v284, %v1245
        %v1285 = vadd.f32 %v285, %v1051
        %v1286 = vadd.f32 %v286, %v1247
        %v1287 = vadd.f32 %v287, %v1054
        %v1288 = vadd.f32 %v288, %v1250
        %v1289 = vadd.f32 %v289, %v1056
        %v1290 = vadd.f32 %v290, %v1252
        %v1291 = vadd.f32 %v291, %v1059
        %v1292 = vadd.f32 %v292, %v1255
        %v1293 = vadd.f32 %v293, %v1061
        %v1294 = vadd.f32 %v294, %v1257
        %v1295 = vadd.f32 %v295, %v1064
        %v1296 = vadd.f32 %v296, %v1260
        %v1297 = vadd.f32 %v297, %v1066
        %v1298 = vadd.f32 %v298, %v1262
        %v1299 = vadd.f32 %v299, %v1069
        %v1300 = vadd.f32 %v300, %v1265
        %v1301 = vadd.f32 %v301, %v1071
        %v1302 = vadd.f32 %v302, %v1267
        %v1303 = vadd.f32 %v303, %v1074
        %v1304 = vadd.f32 %v304, %v1270
        %v1305 = vadd.f32 %v305, %v1076
        %v1306 = vadd.f32 %v306, %v1272
        %v1307 = vadd.f32 %v307, %v1079
        %v1308 = vadd.f32 %v308, %v1275
        %v1309 = vadd.f32 %v309, %v1081
        %v1310 = vadd.f32 %v310, %v1277
        %1311 = vst [vmem:[#allocation2] sm:$0xff] %v1279
        %1312 = vst [vmem:[#allocation2 + $0x8] sm:$0xff] %v1280
        %1313 = vst [vmem:[#allocation2 + $0x10] sm:$0xff] %v1281
        %1314 = vst [vmem:[#allocation2 + $0x18] sm:$0xff] %v1282
        %1315 = vst [vmem:[#allocation2 + $0x20] sm:$0xff] %v1283
        %1316 = vst [vmem:[#allocation2 + $0x28] sm:$0xff] %v1284
        %1317 = vst [vmem:[#allocation2 + $0x30] sm:$0xff] %v1285
        %1318 = vst [vmem:[#allocation2 + $0x38] sm:$0xff] %v1286
        %1319 = vst [vmem:[#allocation2 + $0x40] sm:$0xff] %v1287
        %1320 = vst [vmem:[#allocation2 + $0x48] sm:$0xff] %v1288
        %1321 = vst [vmem:[#allocation2 + $0x50] sm:$0xff] %v1289
        %1322 = vst [vmem:[#allocation2 + $0x58] sm:$0xff] %v1290
        %1323 = vst [vmem:[#allocation2 + $0x60] sm:$0xff] %v1291
        %1324 = vst [vmem:[#allocation2 + $0x68] sm:$0xff] %v1292
        %1325 = vst [vmem:[#allocation2 + $0x70] sm:$0xff] %v1293
        %1326 = vst [vmem:[#allocation2 + $0x78] sm:$0xff] %v1294
        %1327 = vst [vmem:[#allocation2 + $0x80] sm:$0xff] %v1295
        %1328 = vst [vmem:[#allocation2 + $0x88] sm:$0xff] %v1296
        %1329 = vst [vmem:[#allocation2 + $0x90] sm:$0xff] %v1297
        %1330 = vst [vmem:[#allocation2 + $0x98] sm:$0xff] %v1298
        %1331 = vst [vmem:[#allocation2 + $0xa0] sm:$0xff] %v1299
        %1332 = vst [vmem:[#allocation2 + $0xa8] sm:$0xff] %v1300
        %1333 = vst [vmem:[#allocation2 + $0xb0] sm:$0xff] %v1301
        %1334 = vst [vmem:[#allocation2 + $0xb8] sm:$0xff] %v1302
        %1335 = vst [vmem:[#allocation2 + $0xc0] sm:$0xff] %v1303
        %1336 = vst [vmem:[#allocation2 + $0xc8] sm:$0xff] %v1304
        %1337 = vst [vmem:[#allocation2 + $0xd0] sm:$0xff] %v1305
        %1338 = vst [vmem:[#allocation2 + $0xd8] sm:$0xff] %v1306
        %1339 = vst [vmem:[#allocation2 + $0xe0] sm:$0xff] %v1307
        %1340 = vst [vmem:[#allocation2 + $0xe8] sm:$0xff] %v1308
        %1341 = vst [vmem:[#allocation2 + $0xf0] sm:$0xff] %v1309
        %1342 = vst [vmem:[#allocation2 + $0xf8] sm:$0xff] %v1310
        %p1343 = scmp.eq.s32.totalorder %s29, 1
        // Predicated region
        $region41: #{tpu_custom_call.1} parent=27 // pred_check
          %p1344 = pneg %p1343
        $region42: #{tpu_custom_call.1} parent=27 // pred_check_branch
          %1346 = sbr.rel (%p1344) target = $region44
        $region43: #{tpu_custom_call.1} parent=27 // pred_region
          %v1347 = vld [vmem:[#allocation2] sm:$0xff]
          %v1348 = vld [vmem:[#allocation2 + $0x8] sm:$0xff]
          %v1349 = vld [vmem:[#allocation2 + $0x10] sm:$0xff]
          %v1350 = vld [vmem:[#allocation2 + $0x18] sm:$0xff]
          %v1351 = vld [vmem:[#allocation2 + $0x20] sm:$0xff]
          %v1352 = vld [vmem:[#allocation2 + $0x28] sm:$0xff]
          %v1353 = vld [vmem:[#allocation2 + $0x30] sm:$0xff]
          %v1354 = vld [vmem:[#allocation2 + $0x38] sm:$0xff]
          %v1355 = vld [vmem:[#allocation2 + $0x40] sm:$0xff]
          %v1356 = vld [vmem:[#allocation2 + $0x48] sm:$0xff]
          %v1357 = vld [vmem:[#allocation2 + $0x50] sm:$0xff]
          %v1358 = vld [vmem:[#allocation2 + $0x58] sm:$0xff]
          %v1359 = vld [vmem:[#allocation2 + $0x60] sm:$0xff]
          %v1360 = vld [vmem:[#allocation2 + $0x68] sm:$0xff]
          %v1361 = vld [vmem:[#allocation2 + $0x70] sm:$0xff]
          %v1362 = vld [vmem:[#allocation2 + $0x78] sm:$0xff]
          %v1363 = vld [vmem:[#allocation2 + $0x80] sm:$0xff]
          %v1364 = vld [vmem:[#allocation2 + $0x88] sm:$0xff]
          %v1365 = vld [vmem:[#allocation2 + $0x90] sm:$0xff]
          %v1366 = vld [vmem:[#allocation2 + $0x98] sm:$0xff]
          %v1367 = vld [vmem:[#allocation2 + $0xa0] sm:$0xff]
          %v1368 = vld [vmem:[#allocation2 + $0xa8] sm:$0xff]
          %v1369 = vld [vmem:[#allocation2 + $0xb0] sm:$0xff]
          %v1370 = vld [vmem:[#allocation2 + $0xb8] sm:$0xff]
          %v1371 = vld [vmem:[#allocation2 + $0xc0] sm:$0xff]
          %v1372 = vld [vmem:[#allocation2 + $0xc8] sm:$0xff]
          %v1373 = vld [vmem:[#allocation2 + $0xd0] sm:$0xff]
          %v1374 = vld [vmem:[#allocation2 + $0xd8] sm:$0xff]
          %v1375 = vld [vmem:[#allocation2 + $0xe0] sm:$0xff]
          %v1376 = vld [vmem:[#allocation2 + $0xe8] sm:$0xff]
          %v1377 = vld [vmem:[#allocation2 + $0xf0] sm:$0xff]
          %v1378 = vld [vmem:[#allocation2 + $0xf8] sm:$0xff]
          %1379 = vst [vmem:[%s236] sm:$0xff] %v1347
          %1380 = vst [vmem:[%s236 + $0x8] sm:$0xff] %v1348
          %1381 = vst [vmem:[%s236 + $0x10] sm:$0xff] %v1349
          %1382 = vst [vmem:[%s236 + $0x18] sm:$0xff] %v1350
          %1383 = vst [vmem:[%s236 + $0x20] sm:$0xff] %v1351
          %1384 = vst [vmem:[%s236 + $0x28] sm:$0xff] %v1352
          %1385 = vst [vmem:[%s236 + $0x30] sm:$0xff] %v1353
          %1386 = vst [vmem:[%s236 + $0x38] sm:$0xff] %v1354
          %1387 = vst [vmem:[%s236 + $0x40] sm:$0xff] %v1355
          %1388 = vst [vmem:[%s236 + $0x48] sm:$0xff] %v1356
          %1389 = vst [vmem:[%s236 + $0x50] sm:$0xff] %v1357
          %1390 = vst [vmem:[%s236 + $0x58] sm:$0xff] %v1358
          %1391 = vst [vmem:[%s236 + $0x60] sm:$0xff] %v1359
          %1392 = vst [vmem:[%s236 + $0x68] sm:$0xff] %v1360
          %1393 = vst [vmem:[%s236 + $0x70] sm:$0xff] %v1361
          %1394 = vst [vmem:[%s236 + $0x78] sm:$0xff] %v1362
          %1395 = vst [vmem:[%s236 + $0x80] sm:$0xff] %v1363
          %1396 = vst [vmem:[%s236 + $0x88] sm:$0xff] %v1364
          %1397 = vst [vmem:[%s236 + $0x90] sm:$0xff] %v1365
          %1398 = vst [vmem:[%s236 + $0x98] sm:$0xff] %v1366
          %1399 = vst [vmem:[%s236 + $0xa0] sm:$0xff] %v1367
          %1400 = vst [vmem:[%s236 + $0xa8] sm:$0xff] %v1368
          %1401 = vst [vmem:[%s236 + $0xb0] sm:$0xff] %v1369
          %1402 = vst [vmem:[%s236 + $0xb8] sm:$0xff] %v1370
          %1403 = vst [vmem:[%s236 + $0xc0] sm:$0xff] %v1371
          %1404 = vst [vmem:[%s236 + $0xc8] sm:$0xff] %v1372
          %1405 = vst [vmem:[%s236 + $0xd0] sm:$0xff] %v1373
          %1406 = vst [vmem:[%s236 + $0xd8] sm:$0xff] %v1374
          %1407 = vst [vmem:[%s236 + $0xe0] sm:$0xff] %v1375
          %1408 = vst [vmem:[%s236 + $0xe8] sm:$0xff] %v1376
          %1409 = vst [vmem:[%s236 + $0xf0] sm:$0xff] %v1377
          %1410 = vst [vmem:[%s236 + $0xf8] sm:$0xff] %v1378
        $region44: #{tpu_custom_call.1} parent=27 // pred_fallthru
          _
        %s1411 = sand.u32 %s107, 1
        %s1412 = scalar_lea.sflag [#allocation5], %s1411
        %s1413 = sand.u32 %s107, 1
        %s1414 = smul.addr %s1413, 256
        %s1415 = scalar_lea.vmem [#allocation8], %s1414
        // Predicated region
        $region45: #{tpu_custom_call.1} parent=27 // pred_check
          %p1416 = pneg %p117
        $region46: #{tpu_custom_call.1} parent=27 // pred_check_branch
          %1418 = sbr.rel (%p1416) target = $region48
        $region47: #{tpu_custom_call.1} parent=27 // pred_region
          %s1419 = smul.u32 16, %s27
          %s1420 = smul.u32 2, %s28
          %1422 = vsyncadd %s1412, 0
          %s1423 = smul.addr %s1419, 4
          %s1424 = sadd.s32 %s1420, %s1423
          %s1425 = smul.addr %s1424, 8
          %s1426 = scalar_lea.hbm %s2, %s1425
          %s1427 = sshll.u32 %s1415, 4
          %s1428 = int_to_ptr.vmem [resolvable:$true] %s1427
          %s1429 = sshll.u32 %s1426, 4
          %s1430 = int_to_ptr.hbm [resolvable:$true] %s1429
          %1435 = dma.vmem_to_hbm [thread:$0]  %s1428, 4096, %s1430, %s1412, 256, 512, 16
        $region48: #{tpu_custom_call.1} parent=27 // pred_fallthru
          _
      $region28: #{tpu_custom_call.1} parent=5 // pred_fallthru
        _
      %p1436 = scmp.le.s32.totalorder 2, %s17
      // Predicated region
      $region49: #{tpu_custom_call.1} parent=5 // pred_check
        %p1437 = pneg %p1436
      $region50: #{tpu_custom_call.1} parent=5 // pred_check_branch
        %1439 = sbr.rel (%p1437) target = $region52
      $region51: #{tpu_custom_call.1} parent=5 // pred_region
        %s1440 = ssub.s32 %s17, 2
        // Predicated region
        $region53: #{tpu_custom_call.1} parent=51 // pred_check
          %p1441 = pneg %p123
        $region54: #{tpu_custom_call.1} parent=51 // pred_check_branch
          %1443 = sbr.rel (%p1441) target = $region56
        $region55: #{tpu_custom_call.1} parent=51 // pred_region
          %s1444 = sand.u32 %s108, 1
          %s1445 = scalar_lea.sflag [#allocation5], %s1444
          %s1446 = sand.u32 %s108, 1
          %s1447 = smul.addr %s1446, 256
          %s1448 = scalar_lea.vmem [#allocation8], %s1447
          %1450 = dma.done %s1445, 4096
        $region56: #{tpu_custom_call.1} parent=51 // pred_fallthru
          _
      $region52: #{tpu_custom_call.1} parent=5 // pred_fallthru
        _
    $region6: #{tpu_custom_call.1} parent=1 // loop_footer
      %s21 = sadd.s32 1, %s17
    $region7: #{tpu_custom_call.1} parent=1 // loop_footer_branch
      %16 = sbr.rel target = $region3
    $region8: #{tpu_custom_call.1} parent=1 // loop_exit
      _
    %1451 = vsyncpa [#allocation4], 1
    %s1452 = scalar_lea.sflag [#allocation4], 1
    %1453 = vsyncpa %s1452, 1
    %1454 = vsyncpa [#allocation7], 1
    %s1455 = scalar_lea.sflag [#allocation7], 1
    %1456 = vsyncpa %s1455, 1
    %1457 = vsyncpa [#allocation5], 1
    %s1458 = scalar_lea.sflag [#allocation5], 1
    %1459 = vsyncpa %s1458, 1

</llo_original>
